<compile_context>
chip_gen: v6e
topology: v6e:2x2x1
jax: 0.10.0
libtpu: 0.0.40
codegen_flags: <defaults>
</compile_context>

<pallas_src>
import functools

import jax
import jax.numpy as jnp
from jax.experimental import pallas as pl
from jax.experimental.pallas import tpu as pltpu


def _conv1x1_silu_kernel(x_ref, w_ref, b_ref, o_ref, *, use_mxu):
    # x_ref: (C_in, th, tw) pixel tile   w_ref: (C_out, C_in) f32 (resident)
    # b_ref: (C_out, 1, 1)  f32          o_ref: (C_out, th, tw)
    c_in, th, tw = x_ref.shape
    c_out = w_ref.shape[0]
    b = b_ref[...]                                   # (C_out, 1, 1) f32

    if not use_mxu:
        # Tiny-K path on the VPU: unrolled broadcast-MACs keep everything in
        # full-width vregs and skip MXU push/pop latency.  The accumulator is
        # initialized with the bias, saving a separate bias-add pass.
        x = x_ref[...].astype(jnp.float32)           # (C_in, th, tw)
        w = w_ref[...]                               # (C_out, C_in) f32
        y = b + w[:, 0:1, None] * x[0:1]
        for k in range(1, c_in):                     # static unroll, c_in small
            y = y + w[:, k:k + 1, None] * x[k:k + 1]
    else:
        # MXU path for wider channel counts (or v7x / bf16-I/O); f32 accumulate.
        # TODO(synk): for very large C_in/C_out, tile the channel dims instead
        # of reshaping the pixel tile onto the lane axis.
        x2 = x_ref[...].reshape(c_in, th * tw)
        y = jnp.dot(w_ref[...], x2, preferred_element_type=jnp.float32)
        y = y.reshape(c_out, th, tw) + b

    # SiLU in f32; cast only on the final store.
    o_ref[...] = (y * jax.nn.sigmoid(y)).astype(o_ref.dtype)


def _round_down(v, m):
    return (v // m) * m


def _round_up(v, m):
    return ((v + m - 1) // m) * m


@functools.partial(
    jax.jit, static_argnames=("io_dtype", "use_mxu", "target_step_bytes"))
def basic_conv_act(x_nchw, weight, bias, *, io_dtype=None, use_mxu=None,
                   target_step_bytes=8 * 1024 * 1024):
    """Forward of BasicConvAct(kernel_size=1, dilation=1, SiLU, bias=True).

    x_nchw: (N, C_in, H, W)
    weight: (C_out, C_in) or the raw conv weight (C_out, C_in, 1, 1)
    bias:   (C_out,)
    io_dtype: optional narrower activation dtype (e.g. jnp.bfloat16).  Both the
        activation read AND the output write use it; weights/accum stay f32.
    use_mxu: route the channel mix to the MXU.  Default (None): True iff
        C_in > 8.  Set True on v7x or with bf16 I/O where VALU, not HBM, binds.
    """
    N, C_in, H, W = x_nchw.shape
    if weight.ndim == 4:                              # (C_out, C_in, 1, 1)
        weight = weight.reshape(weight.shape[0], weight.shape[1])
    C_out = weight.shape[0]

    # Weight & bias stay f32: tiny and resident across the whole grid
    # (constant index_map), so narrowing them saves zero HBM bandwidth.
    w = weight.astype(jnp.float32)
    b = bias.reshape(C_out, 1, 1).astype(jnp.float32)

    # Narrow the activation stream (this is where the HBM bytes are).
    x = x_nchw if io_dtype is None else x_nchw.astype(io_dtype)
    out_dtype = x.dtype

    if use_mxu is None:
        use_mxu = C_in > 8

    xb = jnp.dtype(x.dtype).itemsize
    ob = jnp.dtype(out_dtype).itemsize

    # --- Tile sizing ---------------------------------------------------------
    # W stays whole (lane axis) unless a 16-row strip of full W already blows
    # the budget, in which case W is split in 128-lane multiples.  The grid
    # uses cdiv; ragged last blocks are padded by Pallas (no host pad/slice).
    SUB = 16      # sublane block granularity valid for both f32 and bf16
    LANE = 128

    w_resident = C_out * C_in * 4 + C_out * 4
    vmem_budget = 28 * 1024 * 1024                    # double-buffered working set
    step_budget = max(
        min(int(target_step_bytes), (vmem_budget - w_resident) // 2), 1)

    bpp = C_in * xb + C_out * ob                      # in+out bytes per pixel
    # VMEM accounting with lane-padded width (a 16-lane tile occupies 128 lanes).
    row_bytes = bpp * _round_up(W, LANE)

    if _round_up(H, SUB) * row_bytes <= step_budget:
        th, tw = H, W                                 # whole image per grid step
    else:
        rows = max(step_budget // row_bytes, 1)
        if rows >= SUB:
            th, tw = _round_down(rows, SUB), W
        else:
            # Even a SUB-row strip of full W is over budget: split W too.
            th = H if H < SUB else SUB
            if W <= LANE:
                tw = W
            else:
                tw = _round_down(max(step_budget // (bpp * th), LANE), LANE)
                tw = max(min(tw, _round_down(W, LANE)), LANE)

    grid = (N, pl.cdiv(H, th), pl.cdiv(W, tw))

    # Raise the scoped-VMEM limit explicitly (v5e default is 16 MiB); cap at
    # 48 MiB so v7x (64 MiB physical VMEM) is always safe.
    tile_bytes = bpp * _round_up(th, SUB) * _round_up(tw, LANE)
    vmem_need = 2 * tile_bytes + w_resident + (1 << 20)
    vmem_limit = min(max(int(vmem_need * 1.25), 32 * 1024 * 1024),
                     48 * 1024 * 1024)

    kernel = functools.partial(_conv1x1_silu_kernel, use_mxu=bool(use_mxu))

    out = pl.pallas_call(
        kernel,
        out_shape=jax.ShapeDtypeStruct((N, C_out, H, W), out_dtype),
        grid=grid,
        in_specs=[
            pl.BlockSpec((None, C_in, th, tw), lambda n, hi, wi: (n, 0, hi, wi)),
            pl.BlockSpec((C_out, C_in), lambda n, hi, wi: (0, 0)),
            pl.BlockSpec((C_out, 1, 1), lambda n, hi, wi: (0, 0, 0)),
        ],
        out_specs=pl.BlockSpec((None, C_out, th, tw),
                               lambda n, hi, wi: (n, 0, hi, wi)),
        compiler_params=pltpu.CompilerParams(
            # All axes independent -> megacore-shardable on v7x.
            dimension_semantics=("parallel", "parallel", "parallel"),
            vmem_limit_bytes=vmem_limit),
    )(x, w, b)
    return out


if __name__ == "__main__":
    key = jax.random.PRNGKey(0)
    k_x, k_w, k_b, k_x2 = jax.random.split(key, 4)

    N, C_in, H, W = 2, 4, 16, 16
    C_out = 8

    x = jax.random.normal(k_x, (N, C_in, H, W), dtype=jnp.float32)
    weight = jax.random.normal(k_w, (C_out, C_in), dtype=jnp.float32) * 0.1
    bias = jax.random.normal(k_b, (C_out,), dtype=jnp.float32) * 0.1

    def ref_fn(xx):
        lin = jnp.einsum("nchw,oc->nohw", xx, weight) + bias[None, :, None, None]
        return lin * jax.nn.sigmoid(lin)

    ref = ref_fn(x)

    # f32 path (exact semantics of the PyTorch module).
    out = jax.block_until_ready(basic_conv_act(x, weight, bias))
    assert out.shape == (N, C_out, H, W) and out.dtype == jnp.float32
    assert jnp.allclose(out, ref, atol=1e-5, rtol=1e-5)

    # bf16 activation I/O: reads AND writes narrowed; weights / accum / SiLU f32.
    out_bf16 = jax.block_until_ready(
        basic_conv_act(x, weight, bias, io_dtype=jnp.bfloat16))
    assert out_bf16.dtype == jnp.bfloat16
    assert jnp.allclose(out_bf16.astype(jnp.float32), ref, atol=3e-2, rtol=3e-2)

    # Ragged H and W: cdiv grid + padded last blocks (no host pad / slice).
    # Tiny per-step budget forces multi-tile with ragged tails on both axes.
    x2 = jax.random.normal(k_x2, (1, C_in, 24, 160), dtype=jnp.float32)
    out2 = jax.block_until_ready(
        basic_conv_act(x2, weight, bias, target_step_bytes=4096))
    assert out2.shape == (1, C_out, 24, 160)
    assert jnp.allclose(out2, ref_fn(x2), atol=1e-5, rtol=1e-5)

    print("KERNEL_OK")
</pallas_src>

<mosaic_0001>
module attributes {stable_mosaic.version = 11 : i64} {
  func.func @_conv1x1_silu_kernel(%arg0: i32, %arg1: i32, %arg2: i32, %arg3: memref<1x4x16x16xf32, #tpu.memory_space<vmem>>, %arg4: memref<8x4xf32, #tpu.memory_space<vmem>>, %arg5: memref<8x1x1xf32, #tpu.memory_space<vmem>>, %arg6: memref<1x8x16x16xf32, #tpu.memory_space<vmem>>) attributes {dimension_semantics = [#tpu.dimension_semantics<parallel>, #tpu.dimension_semantics<parallel>, #tpu.dimension_semantics<parallel>], iteration_bounds = array<i64: 2, 1, 1>, scalar_prefetch = 0 : i64, scratch_operands = 0 : i64, tpu.core_type = #tpu.core_type<tc>, window_params = [{transform_indices = @transform_0, window_bounds = array<i64: 1, 4, 16, 16>}, {pipeline_mode = #tpu.pipeline_mode<synchronous>, transform_indices = @transform_1, window_bounds = array<i64: 8, 4>}, {pipeline_mode = #tpu.pipeline_mode<synchronous>, transform_indices = @transform_2, window_bounds = array<i64: 8, 1, 1>}, {transform_indices = @transform_3, window_bounds = array<i64: 1, 8, 16, 16>}]} {
    %c0 = arith.constant 0 : index
    %c0_0 = arith.constant 0 : index
    %c0_1 = arith.constant 0 : index
    %0 = vector.load %arg5[%c0, %c0_0, %c0_1] : memref<8x1x1xf32, #tpu.memory_space<vmem>>, vector<8x1x1xf32>
    %c0_2 = arith.constant 0 : index
    %c0_3 = arith.constant 0 : index
    %c0_4 = arith.constant 0 : index
    %c0_5 = arith.constant 0 : index
    %1 = vector.load %arg3[%c0_2, %c0_3, %c0_4, %c0_5] : memref<1x4x16x16xf32, #tpu.memory_space<vmem>>, vector<1x4x16x16xf32>
    %2 = vector.shape_cast %1 : vector<1x4x16x16xf32> to vector<4x16x16xf32>
    %c0_6 = arith.constant 0 : index
    %c0_7 = arith.constant 0 : index
    %3 = vector.load %arg4[%c0_6, %c0_7] : memref<8x4xf32, #tpu.memory_space<vmem>>, vector<8x4xf32>
    %4 = vector.extract_strided_slice %3 {offsets = [0, 0], sizes = [8, 1], strides = [1, 1]} : vector<8x4xf32> to vector<8x1xf32>
    %5 = vector.shape_cast %4 : vector<8x1xf32> to vector<8x1x1xf32>
    %6 = vector.extract_strided_slice %2 {offsets = [0, 0, 0], sizes = [1, 16, 16], strides = [1, 1, 1]} : vector<4x16x16xf32> to vector<1x16x16xf32>
    %7 = vector.broadcast %5 : vector<8x1x1xf32> to vector<8x16x16xf32>
    %8 = vector.broadcast %6 : vector<1x16x16xf32> to vector<8x16x16xf32>
    %9 = arith.mulf %7, %8 : vector<8x16x16xf32>
    %10 = vector.broadcast %0 : vector<8x1x1xf32> to vector<8x16x16xf32>
    %11 = arith.addf %10, %9 : vector<8x16x16xf32>
    %12 = vector.extract_strided_slice %3 {offsets = [0, 1], sizes = [8, 1], strides = [1, 1]} : vector<8x4xf32> to vector<8x1xf32>
    %13 = vector.shape_cast %12 : vector<8x1xf32> to vector<8x1x1xf32>
    %14 = vector.extract_strided_slice %2 {offsets = [1, 0, 0], sizes = [1, 16, 16], strides = [1, 1, 1]} : vector<4x16x16xf32> to vector<1x16x16xf32>
    %15 = vector.broadcast %13 : vector<8x1x1xf32> to vector<8x16x16xf32>
    %16 = vector.broadcast %14 : vector<1x16x16xf32> to vector<8x16x16xf32>
    %17 = arith.mulf %15, %16 : vector<8x16x16xf32>
    %18 = arith.addf %11, %17 : vector<8x16x16xf32>
    %19 = vector.extract_strided_slice %3 {offsets = [0, 2], sizes = [8, 1], strides = [1, 1]} : vector<8x4xf32> to vector<8x1xf32>
    %20 = vector.shape_cast %19 : vector<8x1xf32> to vector<8x1x1xf32>
    %21 = vector.extract_strided_slice %2 {offsets = [2, 0, 0], sizes = [1, 16, 16], strides = [1, 1, 1]} : vector<4x16x16xf32> to vector<1x16x16xf32>
    %22 = vector.broadcast %20 : vector<8x1x1xf32> to vector<8x16x16xf32>
    %23 = vector.broadcast %21 : vector<1x16x16xf32> to vector<8x16x16xf32>
    %24 = arith.mulf %22, %23 : vector<8x16x16xf32>
    %25 = arith.addf %18, %24 : vector<8x16x16xf32>
    %26 = vector.extract_strided_slice %3 {offsets = [0, 3], sizes = [8, 1], strides = [1, 1]} : vector<8x4xf32> to vector<8x1xf32>
    %27 = vector.shape_cast %26 : vector<8x1xf32> to vector<8x1x1xf32>
    %28 = vector.extract_strided_slice %2 {offsets = [3, 0, 0], sizes = [1, 16, 16], strides = [1, 1, 1]} : vector<4x16x16xf32> to vector<1x16x16xf32>
    %29 = vector.broadcast %27 : vector<8x1x1xf32> to vector<8x16x16xf32>
    %30 = vector.broadcast %28 : vector<1x16x16xf32> to vector<8x16x16xf32>
    %31 = arith.mulf %29, %30 : vector<8x16x16xf32>
    %32 = arith.addf %25, %31 : vector<8x16x16xf32>
    %33 = arith.negf %32 : vector<8x16x16xf32>
    %34 = math.exp %33 : vector<8x16x16xf32>
    %cst = arith.constant 1.000000e+00 : f32
    %35 = vector.broadcast %cst : f32 to vector<8x16x16xf32>
    %36 = arith.addf %35, %34 : vector<8x16x16xf32>
    %37 = arith.divf %35, %36 : vector<8x16x16xf32>
    %38 = arith.mulf %32, %37 : vector<8x16x16xf32>
    %c0_8 = arith.constant 0 : index
    %c0_9 = arith.constant 0 : index
    %c0_10 = arith.constant 0 : index
    %c0_11 = arith.constant 0 : index
    %39 = vector.load %arg6[%c0_8, %c0_9, %c0_10, %c0_11] : memref<1x8x16x16xf32, #tpu.memory_space<vmem>>, vector<1x8x16x16xf32>
    %40 = vector.shape_cast %39 : vector<1x8x16x16xf32> to vector<8x16x16xf32>
    %41 = vector.shape_cast %38 : vector<8x16x16xf32> to vector<1x8x16x16xf32>
    tpu.vector_store %arg6[%c0_8, %c0_9, %c0_10, %c0_11], %41 {strides = array<i32>} : memref<1x8x16x16xf32, #tpu.memory_space<vmem>>, vector<1x8x16x16xf32>,
    return
  }
  func.func @transform_0(%arg0: i32, %arg1: i32, %arg2: i32) -> (i32, i32, i32, i32) {
    %c0_i32 = arith.constant 0 : i32
    %c0_i32_0 = arith.constant 0 : i32
    return %arg0, %c0_i32, %arg1, %arg2 : i32, i32, i32, i32
  }
  func.func @transform_1(%arg0: i32, %arg1: i32, %arg2: i32) -> (i32, i32) {
    %c0_i32 = arith.constant 0 : i32
    %c0_i32_0 = arith.constant 0 : i32
    %c0_i32_1 = arith.constant 0 : i32
    return %c0_i32, %c0_i32_0 : i32, i32
  }
  func.func @transform_2(%arg0: i32, %arg1: i32, %arg2: i32) -> (i32, i32, i32) {
    %c0_i32 = arith.constant 0 : i32
    %c0_i32_0 = arith.constant 0 : i32
    %c0_i32_1 = arith.constant 0 : i32
    %c0_i32_2 = arith.constant 0 : i32
    return %c0_i32, %c0_i32_0, %c0_i32_1 : i32, i32, i32
  }
  func.func @transform_3(%arg0: i32, %arg1: i32, %arg2: i32) -> (i32, i32, i32, i32) {
    %c0_i32 = arith.constant 0 : i32
    %c0_i32_0 = arith.constant 0 : i32
    return %arg0, %c0_i32, %arg1, %arg2 : i32, i32, i32, i32
  }
}

</mosaic_0001>

<llo_original>
// kernel: basic_conv_act.1
$region0: #{basic_conv_act.1}
  #allocation0 [shape = 'u32[]', space=smem, size = 0x4, offset = 0x4, fixed_abs, tag = 'smem constant byte address 0x4 - core index']
  #allocation1 [shape = 'u32[144,128]{1,0:T(1,128)}', space=vmem, size = 0x12000, scoped, tag = 'internal scratch']
  %s0 = inlined_call_operand.hbm [shape: f32[2,4,16,16], index: 0, kind: input, shape index: {}]
  %s1 = inlined_call_operand.vmem [shape: f32[8,4], index: 1, kind: input, shape index: {}]
  %s2 = inlined_call_operand.vmem [shape: f32[8,1,1], index: 2, kind: input, shape index: {}]
  %s3 = inlined_call_operand.hbm [shape: f32[2,8,16,16], index: 3, kind: output, shape index: {}]
  %s4 = sld [smem:[#allocation0]]
  $region49: #{basic_conv_act.1} parent=0
    _
  %s6 = ssub.s32 1, %s4
  %s7 = scalar_select 0, %s6, %s4
  $region1: #{basic_conv_act.1} parent=0
    #allocation2 [shape = 'u8[65536]{0}', space=vmem, size = 0x10000, scoped, tag = 'input window, operand 0']
    #allocation3 [shape = 's32[2]{0}', space=sflag, size = 0x8, scoped, tag = 'scoped memory for basic_conv_act.1']
    #allocation4 [shape = 's32[2]{0}', space=sflag, size = 0x8, scoped, tag = 'scoped memory for basic_conv_act.1']
    #allocation5 [shape = 'u8[131072]{0}', space=vmem, size = 0x20000, scoped, tag = 'output window, operand 0']
    %8 = vsyncpa [#allocation3], 0
    %s9 = scalar_lea.sflag [#allocation3], 1
    %10 = vsyncpa %s9, 0
    %11 = vsyncpa [#allocation4], 0
    %s12 = scalar_lea.sflag [#allocation4], 1
    %13 = vsyncpa %s12, 0
    loop: start=0, step=1, limit=4
    $region2: #{basic_conv_act.1} parent=1 // loop_pre_header
      _
    $region3: #{basic_conv_act.1} parent=1 // loop_header
      %s15 = sphi 0, %s19
      %p16 = scmp.ge.s32.totalorder %s15, 4
      %s22 = sphi 0, %s41
      %s23 = sphi 0, %s37
      %s24 = sphi 0, %s33
      %s25 = sphi 0, %s22
      %s26 = sphi 0, %s23
      %s27 = sphi 0, %s24
      %s28 = sphi 0, %s25
      %s29 = sphi 0, %s26
      %s30 = sphi 0, %s27
      %s48 = sphi 0, %s50
      %s51 = sphi 0, %s48
      %s52 = sphi 0, %s51
      %s68 = sphi 0, %s52
      %s72 = sphi 0, %s72
      %s74 = sphi 0, %s72
      %s75 = sphi 0, %s74
      %s89 = sphi 0, %s75
      %s93 = sphi 0, %s93
      %s95 = sphi 0, %s93
      %s96 = sphi 0, %s95
      %s110 = sphi 0, %s96
      %s120 = sphi 0, %s122
      %s123 = sphi 0, %s120
      %s124 = sphi 0, %s123
      %s140 = sphi 0, %s124
    $region4: #{basic_conv_act.1} parent=1 // loop_header_branch
      %18 = sbr.rel (%p16) target = $region8
    $region5: #{basic_conv_act.1} parent=1 // loop_body
      %s20 = ssub.s32 %s15, 1
      %s21 = ssub.s32 %s15, 2
      %s31 = sadd.s32 1, %s24
      %p32 = scmp.ge.s32.totalorder %s31, 1
      %s33 = scalar_select %p32, 0, %s31
      %s34 = sadd.s32 1, %s23
      %s35 = scalar_select %p32, %s34, %s23
      %p36 = scmp.ge.s32.totalorder %s35, 1
      %s37 = scalar_select %p36, 0, %s35
      %s38 = sadd.s32 1, %s22
      %s39 = scalar_select %p36, %s38, %s22
      %p40 = scmp.ge.s32.totalorder %s39, 2
      %s41 = scalar_select %p40, 0, %s39
      %s42 = ssub.s32 %s22, %s41
      %s43 = ssub.s32 %s23, %s37
      %s44 = sor.u32 %s42, %s43
      %s45 = ssub.s32 %s24, %s33
      %s46 = sor.u32 %s44, %s45
      %p47 = scmp.eq.s32.totalorder %s46, 0
      %s49 = sadd.s32 %s48, 1
      %s50 = scalar_select %p47, %s48, %s49
      %p53 = pneg %p47
      %p54 = scmp.eq.s32.totalorder %s15, 1
      %p55 = por %p53, %p54
      %p56 = scmp.ne.s32.totalorder %s48, %s51
      %p57 = scmp.eq.s32.totalorder %s15, 0
      %p58 = por %p56, %p57
      %p59 = scmp.ne.s32.totalorder %s48, %s51
      %p60 = scmp.eq.s32.totalorder %s20, 1
      %p61 = por %p59, %p60
      %p62 = scmp.ne.s32.totalorder %s51, %s52
      %p63 = scmp.eq.s32.totalorder %s20, 0
      %p64 = por %p62, %p63
      %p65 = scmp.ne.s32.totalorder %s51, %s52
      %p66 = scmp.eq.s32.totalorder %s21, 1
      %p67 = por %p65, %p66
      %p69 = scmp.ne.s32.totalorder %s52, %s68
      %p70 = scmp.eq.s32.totalorder %s21, 0
      %p71 = por %p69, %p70
      %s73 = sadd.s32 %s72, 1
      %p76 = scmp.eq.s32.totalorder %s15, 1
      %p77 = scmp.ne.s32.totalorder %s72, %s74
      %p78 = scmp.eq.s32.totalorder %s15, 0
      %p79 = por %p77, %p78
      %p80 = scmp.ne.s32.totalorder %s72, %s74
      %p81 = scmp.eq.s32.totalorder %s20, 1
      %p82 = por %p80, %p81
      %p83 = scmp.ne.s32.totalorder %s74, %s75
      %p84 = scmp.eq.s32.totalorder %s20, 0
      %p85 = por %p83, %p84
      %p86 = scmp.ne.s32.totalorder %s74, %s75
      %p87 = scmp.eq.s32.totalorder %s21, 1
      %p88 = por %p86, %p87
      %p90 = scmp.ne.s32.totalorder %s75, %s89
      %p91 = scmp.eq.s32.totalorder %s21, 0
      %p92 = por %p90, %p91
      %s94 = sadd.s32 %s93, 1
      %p97 = scmp.eq.s32.totalorder %s15, 1
      %p98 = scmp.ne.s32.totalorder %s93, %s95
      %p99 = scmp.eq.s32.totalorder %s15, 0
      %p100 = por %p98, %p99
      %p101 = scmp.ne.s32.totalorder %s93, %s95
      %p102 = scmp.eq.s32.totalorder %s20, 1
      %p103 = por %p101, %p102
      %p104 = scmp.ne.s32.totalorder %s95, %s96
      %p105 = scmp.eq.s32.totalorder %s20, 0
      %p106 = por %p104, %p105
      %p107 = scmp.ne.s32.totalorder %s95, %s96
      %p108 = scmp.eq.s32.totalorder %s21, 1
      %p109 = por %p107, %p108
      %p111 = scmp.ne.s32.totalorder %s96, %s110
      %p112 = scmp.eq.s32.totalorder %s21, 0
      %p113 = por %p111, %p112
      %s114 = ssub.s32 %s22, %s41
      %s115 = ssub.s32 %s23, %s37
      %s116 = sor.u32 %s114, %s115
      %s117 = ssub.s32 %s24, %s33
      %s118 = sor.u32 %s116, %s117
      %p119 = scmp.eq.s32.totalorder %s118, 0
      %s121 = sadd.s32 %s120, 1
      %s122 = scalar_select %p119, %s120, %s121
      %p125 = pneg %p119
      %p126 = scmp.eq.s32.totalorder %s15, 1
      %p127 = por %p125, %p126
      %p128 = scmp.ne.s32.totalorder %s120, %s123
      %p129 = scmp.eq.s32.totalorder %s15, 0
      %p130 = por %p128, %p129
      %p131 = scmp.ne.s32.totalorder %s120, %s123
      %p132 = scmp.eq.s32.totalorder %s20, 1
      %p133 = por %p131, %p132
      %p134 = scmp.ne.s32.totalorder %s123, %s124
      %p135 = scmp.eq.s32.totalorder %s20, 0
      %p136 = por %p134, %p135
      %p137 = scmp.ne.s32.totalorder %s123, %s124
      %p138 = scmp.eq.s32.totalorder %s21, 1
      %p139 = por %p137, %p138
      %p141 = scmp.ne.s32.totalorder %s124, %s140
      %p142 = scmp.eq.s32.totalorder %s21, 0
      %p143 = por %p141, %p142
      %p144 = scmp.le.s32.totalorder 1, %s15
      %p145 = scmp.lt.s32.totalorder %s15, 3
      %p146 = pnand %p144, %p145
      %p147 = pneg %p146
      // Predicated region
      $region9: #{basic_conv_act.1} parent=5 // pred_check
        _
      $region10: #{basic_conv_act.1} parent=5 // pred_check_branch
        %149 = sbr.rel (%p146) target = $region12
      $region11: #{basic_conv_act.1} parent=5 // pred_region
        %s150 = ssub.s32 %s15, 1
        // Predicated region
        $region13: #{basic_conv_act.1} parent=11 // pred_check
          %p151 = pneg %p85
        $region14: #{basic_conv_act.1} parent=11 // pred_check_branch
          %153 = sbr.rel (%p151) target = $region16
        $region15: #{basic_conv_act.1} parent=11 // pred_region
          _
        $region16: #{basic_conv_act.1} parent=11 // pred_fallthru
          _
        // Predicated region
        $region17: #{basic_conv_act.1} parent=11 // pred_check
          %p154 = pneg %p106
        $region18: #{basic_conv_act.1} parent=11 // pred_check_branch
          %156 = sbr.rel (%p154) target = $region20
        $region19: #{basic_conv_act.1} parent=11 // pred_region
          _
        $region20: #{basic_conv_act.1} parent=11 // pred_fallthru
          _
      $region12: #{basic_conv_act.1} parent=5 // pred_fallthru
        _
      %p157 = scmp.lt.s32.totalorder %s15, 2
      // Predicated region
      $region21: #{basic_conv_act.1} parent=5 // pred_check
        %p158 = pneg %p157
      $region22: #{basic_conv_act.1} parent=5 // pred_check_branch
        %160 = sbr.rel (%p158) target = $region24
      $region23: #{basic_conv_act.1} parent=5 // pred_region
        // Predicated region
        $region25: #{basic_conv_act.1} parent=23 // pred_check
          %p161 = pneg %p58
        $region26: #{basic_conv_act.1} parent=23 // pred_check_branch
          %163 = sbr.rel (%p161) target = $region28
        $region27: #{basic_conv_act.1} parent=23 // pred_region
          %s164 = sand.u32 %s48, 1
          %s165 = scalar_lea.sflag [#allocation3], %s164
          %s166 = sand.u32 %s48, 1
          %s167 = smul.addr %s166, 64
          %s168 = scalar_lea.vmem [#allocation2], %s167
          %s169 = smul.u32 2, %s23
          %s171 = ssub.s32 1024, 1024
          %172 = vsyncadd %s165, %s171
          %s173 = sadd.s32 %s24, %s169
          %s174 = smul.addr %s22, 8
          %s175 = sadd.s32 %s173, %s174
          %s176 = smul.addr %s175, 128
          %s177 = scalar_lea.hbm %s0, %s176
          %s178 = sshll.u32 %s168, 4
          %s179 = int_to_ptr.vmem [resolvable:$true] %s178
          %184 = dma.hbm_to_vmem [thread:$0]  %s177, 1024, %s179, %s165, 128, 128, 8
        $region28: #{basic_conv_act.1} parent=23 // pred_fallthru
          _
      $region24: #{basic_conv_act.1} parent=5 // pred_fallthru
        _
      %p185 = scmp.le.s32.totalorder 1, %s15
      %p186 = scmp.lt.s32.totalorder %s15, 3
      %p187 = pnand %p185, %p186
      %p188 = pneg %p187
      // Predicated region
      $region29: #{basic_conv_act.1} parent=5 // pred_check
        _
      $region30: #{basic_conv_act.1} parent=5 // pred_check_branch
        %190 = sbr.rel (%p187) target = $region32
      $region31: #{basic_conv_act.1} parent=5 // pred_region
        %s191 = ssub.s32 %s15, 1
        %s192 = sand.u32 %s51, 1
        %s193 = scalar_lea.sflag [#allocation3], %s192
        %s194 = sand.u32 %s51, 1
        %s195 = smul.addr %s194, 64
        %s196 = scalar_lea.vmem [#allocation2], %s195
        // Predicated region
        $region33: #{basic_conv_act.1} parent=31 // pred_check
          %p197 = pneg %p64
        $region34: #{basic_conv_act.1} parent=31 // pred_check_branch
          %199 = sbr.rel (%p197) target = $region36
        $region35: #{basic_conv_act.1} parent=31 // pred_region
          %200 = dma.done %s193, 1024
        $region36: #{basic_conv_act.1} parent=31 // pred_fallthru
          _
        %s201 = sand.u32 %s51, 1
        %s202 = scalar_lea.sflag [#allocation3], %s201
        %s203 = sand.u32 %s51, 1
        %s204 = smul.addr %s203, 64
        %s205 = scalar_lea.vmem [#allocation2], %s204
        %p206 = pneg %p64
        %p207 = pneg %p61
        %p208 = pneg %p85
        %p209 = pneg %p82
        %p210 = pneg %p106
        %p211 = pneg %p103
        %p212 = pneg %p136
        %p213 = pneg %p133
        %s214 = sand.u32 %s123, 1
        %s215 = scalar_lea.sflag [#allocation4], %s214
        %s216 = sand.u32 %s123, 1
        %s217 = smul.addr %s216, 128
        %s218 = scalar_lea.vmem [#allocation5], %s217
        %s219 = smul.u32 2, %s26
        %s220 = smul.u32 2, %s26
        %v221 = vld [vmem:[%s2] sm:$0x1]
        %v222 = vld [vmem:[%s2 + $0x1] sm:$0x1]
        %v223 = vld [vmem:[%s2 + $0x2] sm:$0x1]
        %v224 = vld [vmem:[%s2 + $0x3] sm:$0x1]
        %v225 = vld [vmem:[%s2 + $0x4] sm:$0x1]
        %v226 = vld [vmem:[%s2 + $0x5] sm:$0x1]
        %v227 = vld [vmem:[%s2 + $0x6] sm:$0x1]
        %v228 = vld [vmem:[%s2 + $0x7] sm:$0x1]
        %v229 = vld [vmem:[%s196] sm:$0xff]
        %v230 = vld [vmem:[%s196 + $0x8] sm:$0xff]
        %v231 = vld [vmem:[%s196 + $0x10] sm:$0xff]
        %v232 = vld [vmem:[%s196 + $0x18] sm:$0xff]
        %v233 = vld [vmem:[%s196 + $0x20] sm:$0xff]
        %v234 = vld [vmem:[%s196 + $0x28] sm:$0xff]
        %v235 = vld [vmem:[%s196 + $0x30] sm:$0xff]
        %v236 = vld [vmem:[%s196 + $0x38] sm:$0xff]
        %v237 = vld [vmem:[%s1] sm:$0xff]
        %v239 = vcombine.high %v237, %v237
        %v241 = vunpack.c.l.s4 1966171168
        %v242 = vunpack.c.0.s8 %v241
        %v243 = vlaneseq
        %v244 = vshrl.u32 %v243, 7
        %v245 = vsub.s32 %v242, %v244
        %v246 = vrot.slane %v237, %v245
        %v248 = vunpack.c.l.s4 1966171168
        %v249 = vunpack.c.0.s8 %v248
        %v250 = vlaneseq
        %v251 = vshrl.u32 %v250, 7
        %v252 = vsub.s32 %v249, %v251
        %v253 = vrot.slane %v239, %v252
        %v254 = vcombine.high %v246, %v246
        %v255 = vcombine.high %v253, %v253
        %v257 = vunpack.c.l.s4 1966171168
        %v258 = vunpack.c.0.s8 %v257
        %v259 = vlaneseq
        %v260 = vshrl.u32 %v259, 7
        %v261 = vsub.s32 %v258, %v260
        %v262 = vrot.slane %v246, %v261
        %v264 = vunpack.c.l.s4 1966171168
        %v265 = vunpack.c.0.s8 %v264
        %v266 = vlaneseq
        %v267 = vshrl.u32 %v266, 7
        %v268 = vsub.s32 %v265, %v267
        %v269 = vrot.slane %v253, %v268
        %v271 = vunpack.c.l.s4 1966171168
        %v272 = vunpack.c.0.s8 %v271
        %v273 = vlaneseq
        %v274 = vshrl.u32 %v273, 7
        %v275 = vsub.s32 %v272, %v274
        %v276 = vrot.slane %v254, %v275
        %v278 = vunpack.c.l.s4 1966171168
        %v279 = vunpack.c.0.s8 %v278
        %v280 = vlaneseq
        %v281 = vshrl.u32 %v280, 7
        %v282 = vsub.s32 %v279, %v281
        %v283 = vrot.slane %v255, %v282
        %v284 = vcombine.high %v262, %v262
        %v285 = vcombine.high %v269, %v269
        %v286 = vcombine.high %v276, %v276
        %v287 = vcombine.high %v283, %v283
        %v288 = vlaneseq
        %v289 = vshrl.u32 %v288, 7
        %v290 = vsub.s32 0, %v289
        %v291 = vrot.slane %v262, %v290
        %v292 = vlaneseq
        %v293 = vshrl.u32 %v292, 7
        %v294 = vsub.s32 0, %v293
        %v295 = vrot.slane %v276, %v294
        %v296 = vlaneseq
        %v297 = vshrl.u32 %v296, 7
        %v298 = vsub.s32 0, %v297
        %v299 = vrot.slane %v284, %v298
        %v300 = vlaneseq
        %v301 = vshrl.u32 %v300, 7
        %v302 = vsub.s32 0, %v301
        %v303 = vrot.slane %v286, %v302
        %v304 = vlaneseq
        %v305 = vshrl.u32 %v304, 7
        %v306 = vsub.s32 0, %v305
        %v307 = vrot.slane %v269, %v306
        %v308 = vlaneseq
        %v309 = vshrl.u32 %v308, 7
        %v310 = vsub.s32 0, %v309
        %v311 = vrot.slane %v283, %v310
        %v312 = vlaneseq
        %v313 = vshrl.u32 %v312, 7
        %v314 = vsub.s32 0, %v313
        %v315 = vrot.slane %v285, %v314
        %v316 = vlaneseq
        %v317 = vshrl.u32 %v316, 7
        %v318 = vsub.s32 0, %v317
        %v319 = vrot.slane %v287, %v318
        %320 = vset.pattern.permute.xlu0 0
        %321 = vperm.xlu0 %320, %v291
        %v322 = vpop.permute.xlu0 %321
        %324 = vset.pattern.permute.xlu0 0
        %325 = vperm.xlu0 %324, %v295
        %v326 = vpop.permute.xlu0 %325
        %328 = vset.pattern.permute.xlu0 0
        %329 = vperm.xlu0 %328, %v299
        %v330 = vpop.permute.xlu0 %329
        %332 = vset.pattern.permute.xlu0 0
        %333 = vperm.xlu0 %332, %v303
        %v334 = vpop.permute.xlu0 %333
        %336 = vset.pattern.permute.xlu0 0
        %337 = vperm.xlu0 %336, %v307
        %v338 = vpop.permute.xlu0 %337
        %340 = vset.pattern.permute.xlu0 0
        %341 = vperm.xlu0 %340, %v311
        %v342 = vpop.permute.xlu0 %341
        %344 = vset.pattern.permute.xlu0 0
        %345 = vperm.xlu0 %344, %v315
        %v346 = vpop.permute.xlu0 %345
        %348 = vset.pattern.permute.xlu0 0
        %349 = vperm.xlu0 %348, %v319
        %v350 = vpop.permute.xlu0 %349
        %v352 = vmul.f32 %v322, %v229
        %v353 = vmul.f32 %v322, %v230
        %v354 = vmul.f32 %v326, %v229
        %v355 = vmul.f32 %v326, %v230
        %v356 = vmul.f32 %v330, %v229
        %v357 = vmul.f32 %v330, %v230
        %v358 = vmul.f32 %v334, %v229
        %v359 = vmul.f32 %v334, %v230
        %v360 = vmul.f32 %v338, %v229
        %v361 = vmul.f32 %v338, %v230
        %v362 = vmul.f32 %v342, %v229
        %v363 = vmul.f32 %v342, %v230
        %v364 = vmul.f32 %v346, %v229
        %v365 = vmul.f32 %v346, %v230
        %v366 = vmul.f32 %v350, %v229
        %v367 = vmul.f32 %v350, %v230
        %v376 = vlaneseq
        %v377 = vshrl.u32 %v376, 7
        %v378 = vsub.s32 0, %v377
        %v379 = vrot.slane %v221, %v378
        %v380 = vlaneseq
        %v381 = vshrl.u32 %v380, 7
        %v382 = vsub.s32 0, %v381
        %v383 = vrot.slane %v222, %v382
        %v384 = vlaneseq
        %v385 = vshrl.u32 %v384, 7
        %v386 = vsub.s32 0, %v385
        %v387 = vrot.slane %v223, %v386
        %v388 = vlaneseq
        %v389 = vshrl.u32 %v388, 7
        %v390 = vsub.s32 0, %v389
        %v391 = vrot.slane %v224, %v390
        %v392 = vlaneseq
        %v393 = vshrl.u32 %v392, 7
        %v394 = vsub.s32 0, %v393
        %v395 = vrot.slane %v225, %v394
        %v396 = vlaneseq
        %v397 = vshrl.u32 %v396, 7
        %v398 = vsub.s32 0, %v397
        %v399 = vrot.slane %v226, %v398
        %v400 = vlaneseq
        %v401 = vshrl.u32 %v400, 7
        %v402 = vsub.s32 0, %v401
        %v403 = vrot.slane %v227, %v402
        %v404 = vlaneseq
        %v405 = vshrl.u32 %v404, 7
        %v406 = vsub.s32 0, %v405
        %v407 = vrot.slane %v228, %v406
        %408 = vset.pattern.permute.xlu0 0
        %409 = vperm.xlu0 %408, %v379
        %v410 = vpop.permute.xlu0 %409
        %412 = vset.pattern.permute.xlu0 0
        %413 = vperm.xlu0 %412, %v383
        %v414 = vpop.permute.xlu0 %413
        %416 = vset.pattern.permute.xlu0 0
        %417 = vperm.xlu0 %416, %v387
        %v418 = vpop.permute.xlu0 %417
        %420 = vset.pattern.permute.xlu0 0
        %421 = vperm.xlu0 %420, %v391
        %v422 = vpop.permute.xlu0 %421
        %424 = vset.pattern.permute.xlu0 0
        %425 = vperm.xlu0 %424, %v395
        %v426 = vpop.permute.xlu0 %425
        %428 = vset.pattern.permute.xlu0 0
        %429 = vperm.xlu0 %428, %v399
        %v430 = vpop.permute.xlu0 %429
        %432 = vset.pattern.permute.xlu0 0
        %433 = vperm.xlu0 %432, %v403
        %v434 = vpop.permute.xlu0 %433
        %436 = vset.pattern.permute.xlu0 0
        %437 = vperm.xlu0 %436, %v407
        %v438 = vpop.permute.xlu0 %437
        %v440 = vadd.f32 %v410, %v352
        %v441 = vadd.f32 %v410, %v353
        %v442 = vadd.f32 %v414, %v354
        %v443 = vadd.f32 %v414, %v355
        %v444 = vadd.f32 %v418, %v356
        %v445 = vadd.f32 %v418, %v357
        %v446 = vadd.f32 %v422, %v358
        %v447 = vadd.f32 %v422, %v359
        %v448 = vadd.f32 %v426, %v360
        %v449 = vadd.f32 %v426, %v361
        %v450 = vadd.f32 %v430, %v362
        %v451 = vadd.f32 %v430, %v363
        %v452 = vadd.f32 %v434, %v364
        %v453 = vadd.f32 %v434, %v365
        %v454 = vadd.f32 %v438, %v366
        %v455 = vadd.f32 %v438, %v367
        %456 = vset.pattern.permute.xlu0 1
        %457 = vperm.xlu0 %456, %v291
        %v458 = vpop.permute.xlu0 %457
        %460 = vset.pattern.permute.xlu0 1
        %461 = vperm.xlu0 %460, %v295
        %v462 = vpop.permute.xlu0 %461
        %464 = vset.pattern.permute.xlu0 1
        %465 = vperm.xlu0 %464, %v299
        %v466 = vpop.permute.xlu0 %465
        %468 = vset.pattern.permute.xlu0 1
        %469 = vperm.xlu0 %468, %v303
        %v470 = vpop.permute.xlu0 %469
        %472 = vset.pattern.permute.xlu0 1
        %473 = vperm.xlu0 %472, %v307
        %v474 = vpop.permute.xlu0 %473
        %476 = vset.pattern.permute.xlu0 1
        %477 = vperm.xlu0 %476, %v311
        %v478 = vpop.permute.xlu0 %477
        %480 = vset.pattern.permute.xlu0 1
        %481 = vperm.xlu0 %480, %v315
        %v482 = vpop.permute.xlu0 %481
        %484 = vset.pattern.permute.xlu0 1
        %485 = vperm.xlu0 %484, %v319
        %v486 = vpop.permute.xlu0 %485
        %v488 = vmul.f32 %v458, %v231
        %v489 = vmul.f32 %v458, %v232
        %v490 = vmul.f32 %v462, %v231
        %v491 = vmul.f32 %v462, %v232
        %v492 = vmul.f32 %v466, %v231
        %v493 = vmul.f32 %v466, %v232
        %v494 = vmul.f32 %v470, %v231
        %v495 = vmul.f32 %v470, %v232
        %v496 = vmul.f32 %v474, %v231
        %v497 = vmul.f32 %v474, %v232
        %v498 = vmul.f32 %v478, %v231
        %v499 = vmul.f32 %v478, %v232
        %v500 = vmul.f32 %v482, %v231
        %v501 = vmul.f32 %v482, %v232
        %v502 = vmul.f32 %v486, %v231
        %v503 = vmul.f32 %v486, %v232
        %v504 = vadd.f32 %v440, %v488
        %v505 = vadd.f32 %v441, %v489
        %v506 = vadd.f32 %v442, %v490
        %v507 = vadd.f32 %v443, %v491
        %v508 = vadd.f32 %v444, %v492
        %v509 = vadd.f32 %v445, %v493
        %v510 = vadd.f32 %v446, %v494
        %v511 = vadd.f32 %v447, %v495
        %v512 = vadd.f32 %v448, %v496
        %v513 = vadd.f32 %v449, %v497
        %v514 = vadd.f32 %v450, %v498
        %v515 = vadd.f32 %v451, %v499
        %v516 = vadd.f32 %v452, %v500
        %v517 = vadd.f32 %v453, %v501
        %v518 = vadd.f32 %v454, %v502
        %v519 = vadd.f32 %v455, %v503
        %520 = vset.pattern.permute.xlu0 2
        %521 = vperm.xlu0 %520, %v291
        %v522 = vpop.permute.xlu0 %521
        %524 = vset.pattern.permute.xlu0 2
        %525 = vperm.xlu0 %524, %v295
        %v526 = vpop.permute.xlu0 %525
        %528 = vset.pattern.permute.xlu0 2
        %529 = vperm.xlu0 %528, %v299
        %v530 = vpop.permute.xlu0 %529
        %532 = vset.pattern.permute.xlu0 2
        %533 = vperm.xlu0 %532, %v303
        %v534 = vpop.permute.xlu0 %533
        %536 = vset.pattern.permute.xlu0 2
        %537 = vperm.xlu0 %536, %v307
        %v538 = vpop.permute.xlu0 %537
        %540 = vset.pattern.permute.xlu0 2
        %541 = vperm.xlu0 %540, %v311
        %v542 = vpop.permute.xlu0 %541
        %544 = vset.pattern.permute.xlu0 2
        %545 = vperm.xlu0 %544, %v315
        %v546 = vpop.permute.xlu0 %545
        %548 = vset.pattern.permute.xlu0 2
        %549 = vperm.xlu0 %548, %v319
        %v550 = vpop.permute.xlu0 %549
        %v552 = vmul.f32 %v522, %v233
        %v553 = vmul.f32 %v522, %v234
        %v554 = vmul.f32 %v526, %v233
        %v555 = vmul.f32 %v526, %v234
        %v556 = vmul.f32 %v530, %v233
        %v557 = vmul.f32 %v530, %v234
        %v558 = vmul.f32 %v534, %v233
        %v559 = vmul.f32 %v534, %v234
        %v560 = vmul.f32 %v538, %v233
        %v561 = vmul.f32 %v538, %v234
        %v562 = vmul.f32 %v542, %v233
        %v563 = vmul.f32 %v542, %v234
        %v564 = vmul.f32 %v546, %v233
        %v565 = vmul.f32 %v546, %v234
        %v566 = vmul.f32 %v550, %v233
        %v567 = vmul.f32 %v550, %v234
        %v568 = vadd.f32 %v504, %v552
        %v569 = vadd.f32 %v505, %v553
        %v570 = vadd.f32 %v506, %v554
        %v571 = vadd.f32 %v507, %v555
        %v572 = vadd.f32 %v508, %v556
        %v573 = vadd.f32 %v509, %v557
        %v574 = vadd.f32 %v510, %v558
        %v575 = vadd.f32 %v511, %v559
        %v576 = vadd.f32 %v512, %v560
        %v577 = vadd.f32 %v513, %v561
        %v578 = vadd.f32 %v514, %v562
        %v579 = vadd.f32 %v515, %v563
        %v580 = vadd.f32 %v516, %v564
        %v581 = vadd.f32 %v517, %v565
        %v582 = vadd.f32 %v518, %v566
        %v583 = vadd.f32 %v519, %v567
        %584 = vset.pattern.permute.xlu0 3
        %585 = vperm.xlu0 %584, %v291
        %v586 = vpop.permute.xlu0 %585
        %588 = vset.pattern.permute.xlu0 3
        %589 = vperm.xlu0 %588, %v295
        %v590 = vpop.permute.xlu0 %589
        %592 = vset.pattern.permute.xlu0 3
        %593 = vperm.xlu0 %592, %v299
        %v594 = vpop.permute.xlu0 %593
        %596 = vset.pattern.permute.xlu0 3
        %597 = vperm.xlu0 %596, %v303
        %v598 = vpop.permute.xlu0 %597
        %600 = vset.pattern.permute.xlu0 3
        %601 = vperm.xlu0 %600, %v307
        %v602 = vpop.permute.xlu0 %601
        %604 = vset.pattern.permute.xlu0 3
        %605 = vperm.xlu0 %604, %v311
        %v606 = vpop.permute.xlu0 %605
        %608 = vset.pattern.permute.xlu0 3
        %609 = vperm.xlu0 %608, %v315
        %v610 = vpop.permute.xlu0 %609
        %612 = vset.pattern.permute.xlu0 3
        %613 = vperm.xlu0 %612, %v319
        %v614 = vpop.permute.xlu0 %613
        %v616 = vmul.f32 %v586, %v235
        %v617 = vmul.f32 %v586, %v236
        %v618 = vmul.f32 %v590, %v235
        %v619 = vmul.f32 %v590, %v236
        %v620 = vmul.f32 %v594, %v235
        %v621 = vmul.f32 %v594, %v236
        %v622 = vmul.f32 %v598, %v235
        %v623 = vmul.f32 %v598, %v236
        %v624 = vmul.f32 %v602, %v235
        %v625 = vmul.f32 %v602, %v236
        %v626 = vmul.f32 %v606, %v235
        %v627 = vmul.f32 %v606, %v236
        %v628 = vmul.f32 %v610, %v235
        %v629 = vmul.f32 %v610, %v236
        %v630 = vmul.f32 %v614, %v235
        %v631 = vmul.f32 %v614, %v236
        %v632 = vadd.f32 %v568, %v616
        %v633 = vadd.f32 %v569, %v617
        %v634 = vadd.f32 %v570, %v618
        %v635 = vadd.f32 %v571, %v619
        %v636 = vadd.f32 %v572, %v620
        %v637 = vadd.f32 %v573, %v621
        %v638 = vadd.f32 %v574, %v622
        %v639 = vadd.f32 %v575, %v623
        %v640 = vadd.f32 %v576, %v624
        %v641 = vadd.f32 %v577, %v625
        %v642 = vadd.f32 %v578, %v626
        %v643 = vadd.f32 %v579, %v627
        %v644 = vadd.f32 %v580, %v628
        %v645 = vadd.f32 %v581, %v629
        %v646 = vadd.f32 %v582, %v630
        %v647 = vadd.f32 %v583, %v631
        %v648 = vxor.u32 %v632, 2147483648
        %v649 = vxor.u32 %v633, 2147483648
        %v650 = vxor.u32 %v634, 2147483648
        %v651 = vxor.u32 %v635, 2147483648
        %v652 = vxor.u32 %v636, 2147483648
        %v653 = vxor.u32 %v637, 2147483648
        %v654 = vxor.u32 %v638, 2147483648
        %v655 = vxor.u32 %v639, 2147483648
        %v656 = vxor.u32 %v640, 2147483648
        %v657 = vxor.u32 %v641, 2147483648
        %v658 = vxor.u32 %v642, 2147483648
        %v659 = vxor.u32 %v643, 2147483648
        %v660 = vxor.u32 %v644, 2147483648
        %v661 = vxor.u32 %v645, 2147483648
        %v662 = vxor.u32 %v646, 2147483648
        %v663 = vxor.u32 %v647, 2147483648
        %v664 = vmul.f32 %v648, 1.442695
        %v665 = vpow.pop %v664
        %v666 = vmul.f32 %v649, 1.442695
        %v667 = vpow.pop %v666
        %v668 = vmul.f32 %v650, 1.442695
        %v669 = vpow.pop %v668
        %v670 = vmul.f32 %v651, 1.442695
        %v671 = vpow.pop %v670
        %v672 = vmul.f32 %v652, 1.442695
        %v673 = vpow.pop %v672
        %v674 = vmul.f32 %v653, 1.442695
        %v675 = vpow.pop %v674
        %v676 = vmul.f32 %v654, 1.442695
        %v677 = vpow.pop %v676
        %v678 = vmul.f32 %v655, 1.442695
        %v679 = vpow.pop %v678
        %v680 = vmul.f32 %v656, 1.442695
        %v681 = vpow.pop %v680
        %v682 = vmul.f32 %v657, 1.442695
        %v683 = vpow.pop %v682
        %v684 = vmul.f32 %v658, 1.442695
        %v685 = vpow.pop %v684
        %v686 = vmul.f32 %v659, 1.442695
        %v687 = vpow.pop %v686
        %v688 = vmul.f32 %v660, 1.442695
        %v689 = vpow.pop %v688
        %v690 = vmul.f32 %v661, 1.442695
        %v691 = vpow.pop %v690
        %v692 = vmul.f32 %v662, 1.442695
        %v693 = vpow.pop %v692
        %v694 = vmul.f32 %v663, 1.442695
        %v695 = vpow.pop %v694
        %v696 = vadd.f32 %v665, 1.0
        %v697 = vadd.f32 %v667, 1.0
        %v698 = vadd.f32 %v669, 1.0
        %v699 = vadd.f32 %v671, 1.0
        %v700 = vadd.f32 %v673, 1.0
        %v701 = vadd.f32 %v675, 1.0
        %v702 = vadd.f32 %v677, 1.0
        %v703 = vadd.f32 %v679, 1.0
        %v704 = vadd.f32 %v681, 1.0
        %v705 = vadd.f32 %v683, 1.0
        %v706 = vadd.f32 %v685, 1.0
        %v707 = vadd.f32 %v687, 1.0
        %v708 = vadd.f32 %v689, 1.0
        %v709 = vadd.f32 %v691, 1.0
        %v710 = vadd.f32 %v693, 1.0
        %v711 = vadd.f32 %v695, 1.0
        %v712 = vrcp.pop %v696
        %v713 = vmul.f32 1.0, %v712
        %v714 = vrcp.pop %v697
        %v715 = vmul.f32 1.0, %v714
        %v716 = vrcp.pop %v698
        %v717 = vmul.f32 1.0, %v716
        %v718 = vrcp.pop %v699
        %v719 = vmul.f32 1.0, %v718
        %v720 = vrcp.pop %v700
        %v721 = vmul.f32 1.0, %v720
        %v722 = vrcp.pop %v701
        %v723 = vmul.f32 1.0, %v722
        %v724 = vrcp.pop %v702
        %v725 = vmul.f32 1.0, %v724
        %v726 = vrcp.pop %v703
        %v727 = vmul.f32 1.0, %v726
        %v728 = vrcp.pop %v704
        %v729 = vmul.f32 1.0, %v728
        %v730 = vrcp.pop %v705
        %v731 = vmul.f32 1.0, %v730
        %v732 = vrcp.pop %v706
        %v733 = vmul.f32 1.0, %v732
        %v734 = vrcp.pop %v707
        %v735 = vmul.f32 1.0, %v734
        %v736 = vrcp.pop %v708
        %v737 = vmul.f32 1.0, %v736
        %v738 = vrcp.pop %v709
        %v739 = vmul.f32 1.0, %v738
        %v740 = vrcp.pop %v710
        %v741 = vmul.f32 1.0, %v740
        %v742 = vrcp.pop %v711
        %v743 = vmul.f32 1.0, %v742
        %v744 = vmul.f32 %v632, %v713
        %v745 = vmul.f32 %v633, %v715
        %v746 = vmul.f32 %v634, %v717
        %v747 = vmul.f32 %v635, %v719
        %v748 = vmul.f32 %v636, %v721
        %v749 = vmul.f32 %v637, %v723
        %v750 = vmul.f32 %v638, %v725
        %v751 = vmul.f32 %v639, %v727
        %v752 = vmul.f32 %v640, %v729
        %v753 = vmul.f32 %v641, %v731
        %v754 = vmul.f32 %v642, %v733
        %v755 = vmul.f32 %v643, %v735
        %v756 = vmul.f32 %v644, %v737
        %v757 = vmul.f32 %v645, %v739
        %v758 = vmul.f32 %v646, %v741
        %v759 = vmul.f32 %v647, %v743
        %vm760 = vcmask 130048
        %761 = vst.msk [vmem:[%s218] sm:$0xff] %vm760, %v744
        %762 = vst.msk [vmem:[%s218 + $0x8] sm:$0xff] %vm760, %v745
        %763 = vst.msk [vmem:[%s218 + $0x10] sm:$0xff] %vm760, %v746
        %764 = vst.msk [vmem:[%s218 + $0x18] sm:$0xff] %vm760, %v747
        %765 = vst.msk [vmem:[%s218 + $0x20] sm:$0xff] %vm760, %v748
        %766 = vst.msk [vmem:[%s218 + $0x28] sm:$0xff] %vm760, %v749
        %767 = vst.msk [vmem:[%s218 + $0x30] sm:$0xff] %vm760, %v750
        %768 = vst.msk [vmem:[%s218 + $0x38] sm:$0xff] %vm760, %v751
        %769 = vst.msk [vmem:[%s218 + $0x40] sm:$0xff] %vm760, %v752
        %770 = vst.msk [vmem:[%s218 + $0x48] sm:$0xff] %vm760, %v753
        %771 = vst.msk [vmem:[%s218 + $0x50] sm:$0xff] %vm760, %v754
        %772 = vst.msk [vmem:[%s218 + $0x58] sm:$0xff] %vm760, %v755
        %773 = vst.msk [vmem:[%s218 + $0x60] sm:$0xff] %vm760, %v756
        %774 = vst.msk [vmem:[%s218 + $0x68] sm:$0xff] %vm760, %v757
        %775 = vst.msk [vmem:[%s218 + $0x70] sm:$0xff] %vm760, %v758
        %776 = vst.msk [vmem:[%s218 + $0x78] sm:$0xff] %vm760, %v759
        %s777 = sand.u32 %s123, 1
        %s778 = scalar_lea.sflag [#allocation4], %s777
        %s779 = sand.u32 %s123, 1
        %s780 = smul.addr %s779, 128
        %s781 = scalar_lea.vmem [#allocation5], %s780
        // Predicated region
        $region37: #{basic_conv_act.1} parent=31 // pred_check
          %p782 = pneg %p133
        $region38: #{basic_conv_act.1} parent=31 // pred_check_branch
          %784 = sbr.rel (%p782) target = $region40
        $region39: #{basic_conv_act.1} parent=31 // pred_region
          %s785 = smul.u32 2, %s26
          %s787 = ssub.s32 2048, 2048
          %788 = vsyncadd %s778, %s787
          %s789 = sadd.s32 %s27, %s785
          %s790 = smul.addr %s25, 16
          %s791 = sadd.s32 %s789, %s790
          %s792 = smul.addr %s791, 128
          %s793 = scalar_lea.hbm %s3, %s792
          %s794 = sshll.u32 %s781, 4
          %s795 = int_to_ptr.vmem [resolvable:$true] %s794
          %800 = dma.vmem_to_hbm [thread:$0]  %s795, 2048, %s793, %s778, 128, 128, 8
        $region40: #{basic_conv_act.1} parent=31 // pred_fallthru
          _
      $region32: #{basic_conv_act.1} parent=5 // pred_fallthru
        _
      %p801 = scmp.le.s32.totalorder 2, %s15
      // Predicated region
      $region41: #{basic_conv_act.1} parent=5 // pred_check
        %p802 = pneg %p801
      $region42: #{basic_conv_act.1} parent=5 // pred_check_branch
        %804 = sbr.rel (%p802) target = $region44
      $region43: #{basic_conv_act.1} parent=5 // pred_region
        %s805 = ssub.s32 %s15, 2
        // Predicated region
        $region45: #{basic_conv_act.1} parent=43 // pred_check
          %p806 = pneg %p139
        $region46: #{basic_conv_act.1} parent=43 // pred_check_branch
          %808 = sbr.rel (%p806) target = $region48
        $region47: #{basic_conv_act.1} parent=43 // pred_region
          %s809 = sand.u32 %s124, 1
          %s810 = scalar_lea.sflag [#allocation4], %s809
          %s811 = sand.u32 %s124, 1
          %s812 = smul.addr %s811, 128
          %s813 = scalar_lea.vmem [#allocation5], %s812
          %814 = dma.done %s810, 2048
        $region48: #{basic_conv_act.1} parent=43 // pred_fallthru
          _
      $region44: #{basic_conv_act.1} parent=5 // pred_fallthru
        _
    $region6: #{basic_conv_act.1} parent=1 // loop_footer
      %s19 = sadd.s32 1, %s15
    $region7: #{basic_conv_act.1} parent=1 // loop_footer_branch
      %14 = sbr.rel target = $region3
    $region8: #{basic_conv_act.1} parent=1 // loop_exit
      _
    %815 = vsyncpa [#allocation3], 1
    %s816 = scalar_lea.sflag [#allocation3], 1
    %817 = vsyncpa %s816, 1
    %818 = vsyncpa [#allocation4], 1
    %s819 = scalar_lea.sflag [#allocation4], 1
    %820 = vsyncpa %s819, 1

</llo_original>
